<compile_context>
chip_gen: v6e
topology: v6e:2x2x1
jax: 0.10.0
libtpu: 0.0.40
codegen_flags: <defaults>
</compile_context>

<pallas_src>
import functools

import jax
import jax.numpy as jnp
from jax.experimental import pallas as pl
from jax.experimental.pallas import tpu as pltpu

BN_EPS = 1e-5
NEG_FILL = -1e30      # padded-class bias: exp(-1e30 - m) == 0.0 exactly, no inf-inf
LANE = 128
SUBLANE = 8
MAX_TILE_B = 2048     # bigger tiles amortize per-step overhead; still tiny in VMEM


def _round_up(n, m):
    return (n + m - 1) // m * m


# --------------------------------------------------------------------------- #
# Kernel: one batch tile of the fully fused MLP, batch on the lane axis.
# --------------------------------------------------------------------------- #
def mlp_kernel(x_ref, w1_ref, b1_ref, w2_ref, b2_ref, w3_ref, b3_ref, o_ref):
    # x_ref : (TB, D)      f32   raw features (batch rows on sublanes)
    # w1    : (H1, D)      bf16  b1: (H1, 1) f32   (BN1 affine pre-folded)
    # w2    : (H2, H1)     bf16  b2: (H2, 1) f32   (BN2 affine pre-folded)
    # w3    : (CPAD, H2)   bf16  b3: (CPAD,1) f32  (class pads carry -1e30 bias)
    # o_ref : (CPAD, TB)   f32   log-softmax over the class (sublane) axis
    x = x_ref[...].astype(jnp.bfloat16)

    # fc1 (+ folded bn1) -> relu        (dropout1: identity in eval)
    # h1^T = W1^T @ x^T as a trans_b matmul: contract last dims of both operands.
    h1 = jax.lax.dot_general(
        w1_ref[...], x, (((1,), (1,)), ((), ())),
        preferred_element_type=jnp.float32) + b1_ref[...]
    h1 = jnp.maximum(h1, 0.0)

    # fc2 (+ folded bn2) -> relu        (dropout2: identity in eval)
    h2 = jnp.dot(w2_ref[...], h1.astype(jnp.bfloat16),
                 preferred_element_type=jnp.float32) + b2_ref[...]
    h2 = jnp.maximum(h2, 0.0)

    # fc3 -> log_softmax over the class sublanes (padded classes: exp == 0)
    logits = jnp.dot(w3_ref[...], h2.astype(jnp.bfloat16),
                     preferred_element_type=jnp.float32) + b3_ref[...]
    m = jnp.max(logits, axis=0, keepdims=True)
    lse = m + jnp.log(jnp.sum(jnp.exp(logits - m), axis=0, keepdims=True))
    o_ref[...] = (logits - lse).astype(o_ref.dtype)


# --------------------------------------------------------------------------- #
# Wrapper-side constant folding / transpose / padding / casting (done once).
# --------------------------------------------------------------------------- #
def prepare_params(params):
    """Fold eval-mode BN + biases into the linears, transpose to the
    classes/features-on-sublanes layout, pad classes to 8 sublanes, and cast
    the matmul operands to bf16 (kernel accumulates in f32)."""
    w1, b1 = params["w1"], params["b1"]            # (D, 128), (1, 128)
    w2, b2 = params["w2"], params["b2"]            # (128, 64), (1, 64)
    w3, b3 = params["w3"], params["b3"]            # (64, 3),  (1, 3)

    def bn_fold(w, b, gamma, beta, mean, var):
        scale = gamma / jnp.sqrt(var + BN_EPS)     # (1, n)
        shift = beta - mean * scale
        return w * scale, b * scale + shift        # exact: BN(x@w+b)

    w1f, b1f = bn_fold(w1, b1, params["bn1_gamma"], params["bn1_beta"],
                       params["bn1_mean"], params["bn1_var"])
    w2f, b2f = bn_fold(w2, b2, params["bn2_gamma"], params["bn2_beta"],
                       params["bn2_mean"], params["bn2_var"])

    # Pad class dim to 8 sublanes: zero weight rows, -1e30 bias on the pads.
    c = w3.shape[1]
    c_pad = _round_up(c, SUBLANE)
    w3t = jnp.pad(w3.T, ((0, c_pad - c), (0, 0)))                        # (8, 64)
    b3t = jnp.pad(b3.T, ((0, c_pad - c), (0, 0)), constant_values=NEG_FILL)

    return {
        "w1": w1f.T.astype(jnp.bfloat16), "b1": b1f.T.astype(jnp.float32),  # (128,D),(128,1)
        "w2": w2f.T.astype(jnp.bfloat16), "b2": b2f.T.astype(jnp.float32),  # (64,128),(64,1)
        "w3": w3t.astype(jnp.bfloat16),   "b3": b3t.astype(jnp.float32),    # (8,64),(8,1)
    }


def _choose_tile(batch):
    """(padded_batch, batch_tile).  Small batches: one tile (latency path).
    Larger batches: lane-aligned (multiple of 128) tiles, >=2 grid steps so both
    v7x TensorCores get work, capped at MAX_TILE_B for v5e/v6e efficiency."""
    b8 = _round_up(batch, SUBLANE)
    if b8 <= 256:
        return b8, b8
    tb = min(MAX_TILE_B, _round_up(pl.cdiv(b8, 2), LANE))
    return _round_up(b8, tb), tb


@functools.partial(jax.jit, static_argnames=("n_classes",))
def improved_health_model_forward(x, kp, n_classes=3):
    """x: (B, D) float32. kp: output of prepare_params. Returns (B, n_classes) f32."""
    B, D = x.shape
    h1_dim, d_w = kp["w1"].shape
    h2_dim = kp["w2"].shape[0]
    c_pad = kp["w3"].shape[0]
    assert d_w == D, "feature width mismatch with prepared params"

    b_pad, tb = _choose_tile(B)
    if b_pad != B:                                  # pad only batch rows (cheap, rare)
        x = jnp.pad(x, ((0, b_pad - B), (0, 0)))
    grid = (b_pad // tb,)

    def resident(arr):                              # weights/biases: DMA'd once
        return pl.BlockSpec(arr.shape, lambda i: (0, 0))

    flops = 2 * b_pad * (D * h1_dim + h1_dim * h2_dim + h2_dim * c_pad)
    bytes_accessed = (
        b_pad * D * 4 + c_pad * b_pad * 4 +
        sum(int(kp[k].size) * kp[k].dtype.itemsize
            for k in ("w1", "b1", "w2", "b2", "w3", "b3")))
    cost = pl.CostEstimate(flops=flops,
                           transcendentals=b_pad * (c_pad + 1),
                           bytes_accessed=bytes_accessed)

    out_t = pl.pallas_call(
        mlp_kernel,
        out_shape=jax.ShapeDtypeStruct((c_pad, b_pad), jnp.float32),
        grid=grid,
        in_specs=[
            pl.BlockSpec((tb, D), lambda i: (i, 0)),     # raw f32 input tile
            resident(kp["w1"]), resident(kp["b1"]),
            resident(kp["w2"]), resident(kp["b2"]),
            resident(kp["w3"]), resident(kp["b3"]),
        ],
        out_specs=pl.BlockSpec((c_pad, tb), lambda i: (0, i)),
        compiler_params=pltpu.CompilerParams(
            dimension_semantics=("parallel",)),
        cost_estimate=cost,
    )(x, kp["w1"], kp["b1"], kp["w2"], kp["b2"], kp["w3"], kp["b3"])

    # Tiny slice + transpose back to (B, n_classes).
    return out_t[:n_classes, :B].T


# --------------------------------------------------------------------------- #
# Deterministic synthetic parameters (shapes match the nn.Module) + reference.
# --------------------------------------------------------------------------- #
def init_params(key, in_features, h1=128, h2=64, n_classes=3):
    ks = jax.random.split(key, 8)

    def linear(kw, kb, fan_in, fan_out):
        bound = 1.0 / jnp.sqrt(fan_in)
        w = jax.random.uniform(kw, (fan_in, fan_out), jnp.float32, -bound, bound)
        b = jax.random.uniform(kb, (1, fan_out), jnp.float32, -bound, bound)
        return w, b

    w1, b1 = linear(ks[0], ks[1], in_features, h1)
    w2, b2 = linear(ks[2], ks[3], h1, h2)
    w3, b3 = linear(ks[4], ks[5], h2, n_classes)

    def bn(k, n):
        k1, k2, k3, k4 = jax.random.split(k, 4)
        gamma = 1.0 + 0.1 * jax.random.normal(k1, (1, n), jnp.float32)
        beta = 0.1 * jax.random.normal(k2, (1, n), jnp.float32)
        mean = 0.1 * jax.random.normal(k3, (1, n), jnp.float32)
        var = 1.0 + 0.1 * jax.random.uniform(k4, (1, n), jnp.float32)
        return gamma, beta, mean, var

    g1, be1, m1, v1 = bn(ks[6], h1)
    g2, be2, m2, v2 = bn(ks[7], h2)

    return {
        "w1": w1, "b1": b1, "bn1_gamma": g1, "bn1_beta": be1,
        "bn1_mean": m1, "bn1_var": v1,
        "w2": w2, "b2": b2, "bn2_gamma": g2, "bn2_beta": be2,
        "bn2_mean": m2, "bn2_var": v2,
        "w3": w3, "b3": b3,
    }


def reference_forward(x, p):
    def bn(h, g, b, m, v):
        return (h - m) / jnp.sqrt(v + BN_EPS) * g + b

    a1 = jnp.maximum(bn(x @ p["w1"] + p["b1"], p["bn1_gamma"], p["bn1_beta"],
                        p["bn1_mean"], p["bn1_var"]), 0.0)
    a2 = jnp.maximum(bn(a1 @ p["w2"] + p["b2"], p["bn2_gamma"], p["bn2_beta"],
                        p["bn2_mean"], p["bn2_var"]), 0.0)
    logits = a2 @ p["w3"] + p["b3"]
    return jax.nn.log_softmax(logits, axis=1)


if __name__ == "__main__":
    key = jax.random.PRNGKey(0)
    k_x, k_x2, k_p = jax.random.split(key, 3)

    D = 32       # encoded + scaled tabular feature width (X_scaled.shape[1])
    params = init_params(k_p, D)
    kparams = prepare_params(params)

    # Small latency-path batch: single tile, grid=(1,).
    B = 8
    x = jax.random.normal(k_x, (B, D), jnp.float32)
    out = jax.block_until_ready(improved_health_model_forward(x, kparams, n_classes=3))
    assert out.shape == (B, 3) and out.dtype == jnp.float32
    # log-softmax rows must exp-sum to 1 (padded class sublanes contribute exactly 0)
    assert jnp.allclose(jnp.sum(jnp.exp(out), axis=1), 1.0, atol=1e-5)
    ref = reference_forward(x, params)
    assert jnp.allclose(out, ref, atol=5e-2, rtol=5e-2)

    # Larger batch exercising the tiled/megacore path (grid=(2,), padded batch).
    B2 = 300
    x2 = jax.random.normal(k_x2, (B2, D), jnp.float32)
    out2 = jax.block_until_ready(improved_health_model_forward(x2, kparams, n_classes=3))
    assert out2.shape == (B2, 3)
    assert jnp.allclose(jnp.sum(jnp.exp(out2), axis=1), 1.0, atol=1e-5)
    ref2 = reference_forward(x2, params)
    assert jnp.allclose(out2, ref2, atol=5e-2, rtol=5e-2)

    print("KERNEL_OK")
</pallas_src>

<mosaic_0001>
module attributes {stable_mosaic.version = 11 : i64} {
  func.func @mlp_kernel(%arg0: i32, %arg1: memref<8x32xf32, #tpu.memory_space<vmem>>, %arg2: memref<128x32xbf16, #tpu.memory_space<vmem>>, %arg3: memref<128x1xf32, #tpu.memory_space<vmem>>, %arg4: memref<64x128xbf16, #tpu.memory_space<vmem>>, %arg5: memref<64x1xf32, #tpu.memory_space<vmem>>, %arg6: memref<8x64xbf16, #tpu.memory_space<vmem>>, %arg7: memref<8x1xf32, #tpu.memory_space<vmem>>, %arg8: memref<8x8xf32, #tpu.memory_space<vmem>>) attributes {dimension_semantics = [#tpu.dimension_semantics<parallel>], iteration_bounds = array<i64: 1>, scalar_prefetch = 0 : i64, scratch_operands = 0 : i64, tpu.core_type = #tpu.core_type<tc>, window_params = [{transform_indices = @transform_0, window_bounds = array<i64: 8, 32>}, {pipeline_mode = #tpu.pipeline_mode<synchronous>, transform_indices = @transform_1, window_bounds = array<i64: 128, 32>}, {pipeline_mode = #tpu.pipeline_mode<synchronous>, transform_indices = @transform_2, window_bounds = array<i64: 128, 1>}, {pipeline_mode = #tpu.pipeline_mode<synchronous>, transform_indices = @transform_3, window_bounds = array<i64: 64, 128>}, {pipeline_mode = #tpu.pipeline_mode<synchronous>, transform_indices = @transform_4, window_bounds = array<i64: 64, 1>}, {pipeline_mode = #tpu.pipeline_mode<synchronous>, transform_indices = @transform_5, window_bounds = array<i64: 8, 64>}, {pipeline_mode = #tpu.pipeline_mode<synchronous>, transform_indices = @transform_6, window_bounds = array<i64: 8, 1>}, {transform_indices = @transform_7, window_bounds = array<i64: 8, 8>}]} {
    %c0 = arith.constant 0 : index
    %c0_0 = arith.constant 0 : index
    %0 = vector.load %arg1[%c0, %c0_0] : memref<8x32xf32, #tpu.memory_space<vmem>>, vector<8x32xf32>
    %1 = arith.truncf %0 : vector<8x32xf32> to vector<8x32xbf16>
    %c0_1 = arith.constant 0 : index
    %c0_2 = arith.constant 0 : index
    %2 = vector.load %arg2[%c0_1, %c0_2] : memref<128x32xbf16, #tpu.memory_space<vmem>>, vector<128x32xbf16>
    %cst = arith.constant dense<0.000000e+00> : vector<128x8xf32>
    %3 = tpu.matmul %2, %1, %cst {dimension_numbers = #tpu.dot_dimension_numbers<[1], [1], [0], [0], [0, 0, 1, 0], [], []>} : vector<128x32xbf16>, vector<8x32xbf16>, vector<128x8xf32> -> vector<128x8xf32>
    %c0_3 = arith.constant 0 : index
    %c0_4 = arith.constant 0 : index
    %4 = vector.load %arg3[%c0_3, %c0_4] : memref<128x1xf32, #tpu.memory_space<vmem>>, vector<128x1xf32>
    %5 = vector.broadcast %4 : vector<128x1xf32> to vector<128x8xf32>
    %6 = arith.addf %3, %5 : vector<128x8xf32>
    %cst_5 = arith.constant 0.000000e+00 : f32
    %7 = vector.broadcast %cst_5 : f32 to vector<128x8xf32>
    %8 = arith.maximumf %6, %7 : vector<128x8xf32>
    %c0_6 = arith.constant 0 : index
    %c0_7 = arith.constant 0 : index
    %9 = vector.load %arg4[%c0_6, %c0_7] : memref<64x128xbf16, #tpu.memory_space<vmem>>, vector<64x128xbf16>
    %10 = arith.truncf %8 : vector<128x8xf32> to vector<128x8xbf16>
    %cst_8 = arith.constant dense<0.000000e+00> : vector<64x8xf32>
    %11 = tpu.matmul %9, %10, %cst_8 {dimension_numbers = #tpu.dot_dimension_numbers<[1], [0], [0], [1], [0, 0, 1, 1], [], []>} : vector<64x128xbf16>, vector<128x8xbf16>, vector<64x8xf32> -> vector<64x8xf32>
    %c0_9 = arith.constant 0 : index
    %c0_10 = arith.constant 0 : index
    %12 = vector.load %arg5[%c0_9, %c0_10] : memref<64x1xf32, #tpu.memory_space<vmem>>, vector<64x1xf32>
    %13 = vector.broadcast %12 : vector<64x1xf32> to vector<64x8xf32>
    %14 = arith.addf %11, %13 : vector<64x8xf32>
    %cst_11 = arith.constant 0.000000e+00 : f32
    %15 = vector.broadcast %cst_11 : f32 to vector<64x8xf32>
    %16 = arith.maximumf %14, %15 : vector<64x8xf32>
    %c0_12 = arith.constant 0 : index
    %c0_13 = arith.constant 0 : index
    %17 = vector.load %arg6[%c0_12, %c0_13] : memref<8x64xbf16, #tpu.memory_space<vmem>>, vector<8x64xbf16>
    %18 = arith.truncf %16 : vector<64x8xf32> to vector<64x8xbf16>
    %cst_14 = arith.constant dense<0.000000e+00> : vector<8x8xf32>
    %19 = tpu.matmul %17, %18, %cst_14 {dimension_numbers = #tpu.dot_dimension_numbers<[1], [0], [0], [1], [0, 0, 1, 1], [], []>} : vector<8x64xbf16>, vector<64x8xbf16>, vector<8x8xf32> -> vector<8x8xf32>
    %c0_15 = arith.constant 0 : index
    %c0_16 = arith.constant 0 : index
    %20 = vector.load %arg7[%c0_15, %c0_16] : memref<8x1xf32, #tpu.memory_space<vmem>>, vector<8x1xf32>
    %21 = vector.broadcast %20 : vector<8x1xf32> to vector<8x8xf32>
    %22 = arith.addf %19, %21 : vector<8x8xf32>
    %cst_17 = arith.constant dense<0xFF800000> : vector<8xf32>
    %23 = vector.multi_reduction <maximumf>, %22, %cst_17 [0] : vector<8x8xf32> to vector<8xf32>
    %24 = vector.shape_cast %23 : vector<8xf32> to vector<1x8xf32>
    %25 = vector.broadcast %24 : vector<1x8xf32> to vector<8x8xf32>
    %26 = arith.subf %22, %25 : vector<8x8xf32>
    %27 = math.exp %26 : vector<8x8xf32>
    %cst_18 = arith.constant dense<0.000000e+00> : vector<8xf32>
    %28 = vector.multi_reduction <add>, %27, %cst_18 [0] : vector<8x8xf32> to vector<8xf32>
    %29 = vector.shape_cast %28 : vector<8xf32> to vector<1x8xf32>
    %30 = math.log %29 : vector<1x8xf32>
    %31 = arith.addf %24, %30 : vector<1x8xf32>
    %32 = vector.broadcast %31 : vector<1x8xf32> to vector<8x8xf32>
    %33 = arith.subf %22, %32 : vector<8x8xf32>
    %c0_19 = arith.constant 0 : index
    %c0_20 = arith.constant 0 : index
    %34 = vector.load %arg8[%c0_19, %c0_20] : memref<8x8xf32, #tpu.memory_space<vmem>>, vector<8x8xf32>
    tpu.vector_store %arg8[%c0_19, %c0_20], %33 {strides = array<i32>} : memref<8x8xf32, #tpu.memory_space<vmem>>, vector<8x8xf32>,
    return
  }
  func.func @transform_0(%arg0: i32) -> (i32, i32) {
    %c0_i32 = arith.constant 0 : i32
    %c0_i32_0 = arith.constant 0 : i32
    return %arg0, %c0_i32 : i32, i32
  }
  func.func @transform_1(%arg0: i32) -> (i32, i32) {
    %c0_i32 = arith.constant 0 : i32
    %c0_i32_0 = arith.constant 0 : i32
    %c0_i32_1 = arith.constant 0 : i32
    return %c0_i32, %c0_i32_0 : i32, i32
  }
  func.func @transform_2(%arg0: i32) -> (i32, i32) {
    %c0_i32 = arith.constant 0 : i32
    %c0_i32_0 = arith.constant 0 : i32
    %c0_i32_1 = arith.constant 0 : i32
    return %c0_i32, %c0_i32_0 : i32, i32
  }
  func.func @transform_3(%arg0: i32) -> (i32, i32) {
    %c0_i32 = arith.constant 0 : i32
    %c0_i32_0 = arith.constant 0 : i32
    %c0_i32_1 = arith.constant 0 : i32
    return %c0_i32, %c0_i32_0 : i32, i32
  }
  func.func @transform_4(%arg0: i32) -> (i32, i32) {
    %c0_i32 = arith.constant 0 : i32
    %c0_i32_0 = arith.constant 0 : i32
    %c0_i32_1 = arith.constant 0 : i32
    return %c0_i32, %c0_i32_0 : i32, i32
  }
  func.func @transform_5(%arg0: i32) -> (i32, i32) {
    %c0_i32 = arith.constant 0 : i32
    %c0_i32_0 = arith.constant 0 : i32
    %c0_i32_1 = arith.constant 0 : i32
    return %c0_i32, %c0_i32_0 : i32, i32
  }
  func.func @transform_6(%arg0: i32) -> (i32, i32) {
    %c0_i32 = arith.constant 0 : i32
    %c0_i32_0 = arith.constant 0 : i32
    %c0_i32_1 = arith.constant 0 : i32
    return %c0_i32, %c0_i32_0 : i32, i32
  }
  func.func @transform_7(%arg0: i32) -> (i32, i32) {
    %c0_i32 = arith.constant 0 : i32
    %c0_i32_0 = arith.constant 0 : i32
    return %c0_i32, %arg0 : i32, i32
  }
}

</mosaic_0001>

<llo_original>
// kernel: improved_health_model_forward.1
$region0: #{improved_health_model_forward.1}
  #allocation0 [shape = 'u32[]', space=smem, size = 0x4, offset = 0x4, fixed_abs, tag = 'smem constant byte address 0x4 - core index']
  #allocation1 [shape = 'u32[144,128]{1,0:T(1,128)}', space=vmem, size = 0x12000, scoped, tag = 'internal scratch']
  %s0 = inlined_call_operand.vmem [shape: f32[8,32], index: 0, kind: input, shape index: {}]
  %s1 = inlined_call_operand.vmem [shape: bf16[128,32], index: 1, kind: input, shape index: {}]
  %s2 = inlined_call_operand.vmem [shape: f32[128,1], index: 2, kind: input, shape index: {}]
  %s3 = inlined_call_operand.vmem [shape: bf16[64,128], index: 3, kind: input, shape index: {}]
  %s4 = inlined_call_operand.vmem [shape: f32[64,1], index: 4, kind: input, shape index: {}]
  %s5 = inlined_call_operand.vmem [shape: bf16[8,64], index: 5, kind: input, shape index: {}]
  %s6 = inlined_call_operand.vmem [shape: f32[8,1], index: 6, kind: input, shape index: {}]
  %s7 = inlined_call_operand.vmem [shape: f32[8,8], index: 7, kind: output, shape index: {}]
  %s8 = sld [smem:[#allocation0]]
  $region38: #{improved_health_model_forward.1} parent=0
    _
  %s10 = ssub.s32 1, %s8
  %s11 = scalar_select 0, %s10, %s8
  // Predicated region
  $region2: #{improved_health_model_forward.1} parent=0 // pred_check
    _
  $region3: #{improved_health_model_forward.1} parent=0 // pred_check_branch
    %13 = sbr.rel (0) target = $region5
  $region4: #{improved_health_model_forward.1} parent=0 // pred_region
    _
  $region5: #{improved_health_model_forward.1} parent=0 // pred_fallthru
    _
  // Predicated region
  $region6: #{improved_health_model_forward.1} parent=0 // pred_check
    _
  $region7: #{improved_health_model_forward.1} parent=0 // pred_check_branch
    %15 = sbr.rel (0) target = $region9
  $region8: #{improved_health_model_forward.1} parent=0 // pred_region
    _
  $region9: #{improved_health_model_forward.1} parent=0 // pred_fallthru
    _
  // Predicated region
  $region10: #{improved_health_model_forward.1} parent=0 // pred_check
    _
  $region11: #{improved_health_model_forward.1} parent=0 // pred_check_branch
    %17 = sbr.rel (0) target = $region13
  $region12: #{improved_health_model_forward.1} parent=0 // pred_region
    _
  $region13: #{improved_health_model_forward.1} parent=0 // pred_fallthru
    _
  // Predicated region
  $region14: #{improved_health_model_forward.1} parent=0 // pred_check
    _
  $region15: #{improved_health_model_forward.1} parent=0 // pred_check_branch
    %19 = sbr.rel (0) target = $region17
  $region16: #{improved_health_model_forward.1} parent=0 // pred_region
    _
  $region17: #{improved_health_model_forward.1} parent=0 // pred_fallthru
    _
  // Predicated region
  $region18: #{improved_health_model_forward.1} parent=0 // pred_check
    _
  $region19: #{improved_health_model_forward.1} parent=0 // pred_check_branch
    %21 = sbr.rel (0) target = $region21
  $region20: #{improved_health_model_forward.1} parent=0 // pred_region
    _
  $region21: #{improved_health_model_forward.1} parent=0 // pred_fallthru
    _
  // Predicated region
  $region22: #{improved_health_model_forward.1} parent=0 // pred_check
    _
  $region23: #{improved_health_model_forward.1} parent=0 // pred_check_branch
    %23 = sbr.rel (0) target = $region25
  $region24: #{improved_health_model_forward.1} parent=0 // pred_region
    _
  $region25: #{improved_health_model_forward.1} parent=0 // pred_fallthru
    _
  // Predicated region
  $region26: #{improved_health_model_forward.1} parent=0 // pred_check
    _
  $region27: #{improved_health_model_forward.1} parent=0 // pred_check_branch
    %25 = sbr.rel (0) target = $region29
  $region28: #{improved_health_model_forward.1} parent=0 // pred_region
    _
  $region29: #{improved_health_model_forward.1} parent=0 // pred_fallthru
    _
  %v27 = vld [vmem:[%s0] sm:$0xff]
  %v28 = vpack.c.bf16 %v27, %v27
  %v29 = vld [vmem:[%s1] sm:$0xf]
  %v30 = vld [vmem:[%s1 + $0x4] sm:$0xf]
  %v31 = vld [vmem:[%s1 + $0x8] sm:$0xf]
  %v32 = vld [vmem:[%s1 + $0xc] sm:$0xf]
  %v33 = vld [vmem:[%s1 + $0x10] sm:$0xf]
  %v34 = vld [vmem:[%s1 + $0x14] sm:$0xf]
  %v35 = vld [vmem:[%s1 + $0x18] sm:$0xf]
  %v36 = vld [vmem:[%s1 + $0x1c] sm:$0xf]
  %v37 = vld [vmem:[%s1 + $0x20] sm:$0xf]
  %v38 = vld [vmem:[%s1 + $0x24] sm:$0xf]
  %v39 = vld [vmem:[%s1 + $0x28] sm:$0xf]
  %v40 = vld [vmem:[%s1 + $0x2c] sm:$0xf]
  %v41 = vld [vmem:[%s1 + $0x30] sm:$0xf]
  %v42 = vld [vmem:[%s1 + $0x34] sm:$0xf]
  %v43 = vld [vmem:[%s1 + $0x38] sm:$0xf]
  %v44 = vld [vmem:[%s1 + $0x3c] sm:$0xf]
  %v45 = vld [vmem:[%s2] sm:$0xff]
  %v46 = vld [vmem:[%s2 + $0x8] sm:$0xff]
  %v47 = vld [vmem:[%s2 + $0x10] sm:$0xff]
  %v48 = vld [vmem:[%s2 + $0x18] sm:$0xff]
  %v49 = vld [vmem:[%s2 + $0x20] sm:$0xff]
  %v50 = vld [vmem:[%s2 + $0x28] sm:$0xff]
  %v51 = vld [vmem:[%s2 + $0x30] sm:$0xff]
  %v52 = vld [vmem:[%s2 + $0x38] sm:$0xff]
  %v53 = vld [vmem:[%s2 + $0x40] sm:$0xff]
  %v54 = vld [vmem:[%s2 + $0x48] sm:$0xff]
  %v55 = vld [vmem:[%s2 + $0x50] sm:$0xff]
  %v56 = vld [vmem:[%s2 + $0x58] sm:$0xff]
  %v57 = vld [vmem:[%s2 + $0x60] sm:$0xff]
  %v58 = vld [vmem:[%s2 + $0x68] sm:$0xff]
  %v59 = vld [vmem:[%s2 + $0x70] sm:$0xff]
  %v60 = vld [vmem:[%s2 + $0x78] sm:$0xff]
  %62 = vset.pattern.permute.xlu0 0
  %63 = vperm.xlu0 %62, %v45
  %v64 = vpop.permute.xlu0 %63
  %67 = vset.pattern.permute.xlu0 0
  %68 = vperm.xlu0 %67, %v46
  %v69 = vpop.permute.xlu0 %68
  %72 = vset.pattern.permute.xlu0 0
  %73 = vperm.xlu0 %72, %v47
  %v74 = vpop.permute.xlu0 %73
  %77 = vset.pattern.permute.xlu0 0
  %78 = vperm.xlu0 %77, %v48
  %v79 = vpop.permute.xlu0 %78
  %82 = vset.pattern.permute.xlu0 0
  %83 = vperm.xlu0 %82, %v49
  %v84 = vpop.permute.xlu0 %83
  %87 = vset.pattern.permute.xlu0 0
  %88 = vperm.xlu0 %87, %v50
  %v89 = vpop.permute.xlu0 %88
  %92 = vset.pattern.permute.xlu0 0
  %93 = vperm.xlu0 %92, %v51
  %v94 = vpop.permute.xlu0 %93
  %97 = vset.pattern.permute.xlu0 0
  %98 = vperm.xlu0 %97, %v52
  %v99 = vpop.permute.xlu0 %98
  %102 = vset.pattern.permute.xlu0 0
  %103 = vperm.xlu0 %102, %v53
  %v104 = vpop.permute.xlu0 %103
  %107 = vset.pattern.permute.xlu0 0
  %108 = vperm.xlu0 %107, %v54
  %v109 = vpop.permute.xlu0 %108
  %112 = vset.pattern.permute.xlu0 0
  %113 = vperm.xlu0 %112, %v55
  %v114 = vpop.permute.xlu0 %113
  %117 = vset.pattern.permute.xlu0 0
  %118 = vperm.xlu0 %117, %v56
  %v119 = vpop.permute.xlu0 %118
  %122 = vset.pattern.permute.xlu0 0
  %123 = vperm.xlu0 %122, %v57
  %v124 = vpop.permute.xlu0 %123
  %127 = vset.pattern.permute.xlu0 0
  %128 = vperm.xlu0 %127, %v58
  %v129 = vpop.permute.xlu0 %128
  %132 = vset.pattern.permute.xlu0 0
  %133 = vperm.xlu0 %132, %v59
  %v134 = vpop.permute.xlu0 %133
  %137 = vset.pattern.permute.xlu0 0
  %138 = vperm.xlu0 %137, %v60
  %v139 = vpop.permute.xlu0 %138
  %v157 = vunpack.c.l.b16 %v29
  %v158 = vunpack.c.l.b16 %v30
  %v159 = vunpack.c.l.b16 %v31
  %v160 = vunpack.c.l.b16 %v32
  %v161 = vunpack.c.l.b16 %v33
  %v162 = vunpack.c.l.b16 %v34
  %v163 = vunpack.c.l.b16 %v35
  %v164 = vunpack.c.l.b16 %v36
  %v165 = vunpack.c.l.b16 %v37
  %v166 = vunpack.c.l.b16 %v38
  %v167 = vunpack.c.l.b16 %v39
  %v168 = vunpack.c.l.b16 %v40
  %v169 = vunpack.c.l.b16 %v41
  %v170 = vunpack.c.l.b16 %v42
  %v171 = vunpack.c.l.b16 %v43
  %v172 = vunpack.c.l.b16 %v44
  %v173 = vpack.c.b16 %v158, %v157
  %v174 = vpack.c.b16 %v160, %v159
  %v175 = vpack.c.b16 %v162, %v161
  %v176 = vpack.c.b16 %v164, %v163
  %v177 = vpack.c.b16 %v166, %v165
  %v178 = vpack.c.b16 %v168, %v167
  %v179 = vpack.c.b16 %v170, %v169
  %v180 = vpack.c.b16 %v172, %v171
  %vm181 = vcmask 261120
  %v183 = vsel %vm181, %v173, 0
  %v186 = vsel %vm181, %v174, 0
  %v189 = vsel %vm181, %v175, 0
  %v192 = vsel %vm181, %v176, 0
  %v195 = vsel %vm181, %v177, 0
  %v198 = vsel %vm181, %v178, 0
  %v201 = vsel %vm181, %v179, 0
  %v204 = vsel %vm181, %v180, 0
  %v207 = vsel %vm181, %v28, 0
  %209 = vmatprep.subr.bf16.mxu0 0
  %210 = vmatpush1.bf16.xpose.msra.mxu0 0
  %211 = vmatprep.subr.bf16.mxu0 0
  %212 = vmatpush1.bf16.xpose.msra.mxu0 0
  %213 = vmatprep.subr.bf16.mxu0 0
  %214 = vmatpush1.bf16.xpose.msra.mxu0 0
  %215 = vmatprep.subr.bf16.mxu0 0
  %216 = vmatpush1.bf16.xpose.msra.mxu0 0
  %217 = vmatprep.subr.bf16.mxu0 0
  %218 = vmatpush1.bf16.xpose.msra.mxu0 0
  %219 = vmatprep.subr.bf16.mxu0 0
  %220 = vmatpush1.bf16.xpose.msra.mxu0 0
  %221 = vmatprep.subr.bf16.mxu0 0
  %222 = vmatpush1.bf16.xpose.msra.mxu0 0
  %223 = vmatprep.subr.bf16.mxu0 0
  %224 = vmatpush1.bf16.xpose.msra.mxu0 %v207
  %225 = vmatprep.subr.bf16.mxu0 0
  %226 = vmatpush2.bf16.xpose.msra.mxu0 0
  %227 = vmatprep.subr.bf16.mxu0 0
  %228 = vmatpush2.bf16.xpose.msra.mxu0 0
  %229 = vmatprep.subr.bf16.mxu0 0
  %230 = vmatpush2.bf16.xpose.msra.mxu0 0
  %231 = vmatprep.subr.bf16.mxu0 0
  %232 = vmatpush2.bf16.xpose.msra.mxu0 0
  %233 = vmatprep.subr.bf16.mxu0 0
  %234 = vmatpush2.bf16.xpose.msra.mxu0 0
  %235 = vmatprep.subr.bf16.mxu0 0
  %236 = vmatpush2.bf16.xpose.msra.mxu0 0
  %237 = vmatprep.subr.bf16.mxu0 0
  %238 = vmatpush2.bf16.xpose.msra.mxu0 0
  %239 = vmatprep.subr.bf16.mxu0 0
  %240 = vmatpush2.bf16.xpose.msra.mxu0 0
  %241 = vmatprep.mubr.bf16.mxu0 0
  %242 = vmatmul.mubr.bf16.gmra.mxu0 %v183
  %v243 = vpop.f32.mrf.mxu0
  %v244 = vadd.f32 %v64, %v243
  %v245 = vpop.f32.mrf.mxu0
  %v246 = vpop.f32.mrf.mxu0
  %v247 = vadd.f32 %v69, %v246
  %v248 = vpop.f32.mrf.mxu0
  %249 = vmatprep.mubr.bf16.mxu0 0
  %250 = vmatmul.mubr.bf16.gmra.mxu0 %v186
  %v251 = vpop.f32.mrf.mxu0
  %v252 = vadd.f32 %v74, %v251
  %v253 = vpop.f32.mrf.mxu0
  %v254 = vpop.f32.mrf.mxu0
  %v255 = vadd.f32 %v79, %v254
  %v256 = vpop.f32.mrf.mxu0
  %257 = vmatprep.mubr.bf16.mxu0 0
  %258 = vmatmul.mubr.bf16.gmra.mxu0 %v189
  %v259 = vpop.f32.mrf.mxu0
  %v260 = vadd.f32 %v84, %v259
  %v261 = vpop.f32.mrf.mxu0
  %v262 = vpop.f32.mrf.mxu0
  %v263 = vadd.f32 %v89, %v262
  %v264 = vpop.f32.mrf.mxu0
  %265 = vmatprep.mubr.bf16.mxu0 0
  %266 = vmatmul.mubr.bf16.gmra.mxu0 %v192
  %v267 = vpop.f32.mrf.mxu0
  %v268 = vadd.f32 %v94, %v267
  %v269 = vpop.f32.mrf.mxu0
  %v270 = vpop.f32.mrf.mxu0
  %v271 = vadd.f32 %v99, %v270
  %v272 = vpop.f32.mrf.mxu0
  %273 = vmatprep.mubr.bf16.mxu0 0
  %274 = vmatmul.mubr.bf16.gmra.mxu0 %v195
  %v275 = vpop.f32.mrf.mxu0
  %v276 = vadd.f32 %v104, %v275
  %v277 = vpop.f32.mrf.mxu0
  %v278 = vpop.f32.mrf.mxu0
  %v279 = vadd.f32 %v109, %v278
  %v280 = vpop.f32.mrf.mxu0
  %281 = vmatprep.mubr.bf16.mxu0 0
  %282 = vmatmul.mubr.bf16.gmra.mxu0 %v198
  %v283 = vpop.f32.mrf.mxu0
  %v284 = vadd.f32 %v114, %v283
  %v285 = vpop.f32.mrf.mxu0
  %v286 = vpop.f32.mrf.mxu0
  %v287 = vadd.f32 %v119, %v286
  %v288 = vpop.f32.mrf.mxu0
  %289 = vmatprep.mubr.bf16.mxu0 0
  %290 = vmatmul.mubr.bf16.gmra.mxu0 %v201
  %v291 = vpop.f32.mrf.mxu0
  %v292 = vadd.f32 %v124, %v291
  %v293 = vpop.f32.mrf.mxu0
  %v294 = vpop.f32.mrf.mxu0
  %v295 = vadd.f32 %v129, %v294
  %v296 = vpop.f32.mrf.mxu0
  %297 = vmatprep.mubr.bf16.mxu0 0
  %298 = vmatmul.mubr.bf16.gmra.mxu0 %v204
  %v299 = vpop.f32.mrf.mxu0
  %v300 = vadd.f32 %v134, %v299
  %v301 = vpop.f32.mrf.mxu0
  %v302 = vpop.f32.mrf.mxu0
  %v303 = vadd.f32 %v139, %v302
  %v304 = vpop.f32.mrf.mxu0
  %305 = vdwg.mxu0
  %v306 = vmax.f32 %v244, 0.0
  %v307 = vmax.f32 %v247, 0.0
  %v308 = vmax.f32 %v252, 0.0
  %v309 = vmax.f32 %v255, 0.0
  %v310 = vmax.f32 %v260, 0.0
  %v311 = vmax.f32 %v263, 0.0
  %v312 = vmax.f32 %v268, 0.0
  %v313 = vmax.f32 %v271, 0.0
  %v314 = vmax.f32 %v276, 0.0
  %v315 = vmax.f32 %v279, 0.0
  %v316 = vmax.f32 %v284, 0.0
  %v317 = vmax.f32 %v287, 0.0
  %v318 = vmax.f32 %v292, 0.0
  %v319 = vmax.f32 %v295, 0.0
  %v320 = vmax.f32 %v300, 0.0
  %v321 = vmax.f32 %v303, 0.0
  %v322 = vld [vmem:[%s3] sm:$0xf]
  %v323 = vld [vmem:[%s3 + $0x4] sm:$0xf]
  %v324 = vld [vmem:[%s3 + $0x8] sm:$0xf]
  %v325 = vld [vmem:[%s3 + $0xc] sm:$0xf]
  %v326 = vld [vmem:[%s3 + $0x10] sm:$0xf]
  %v327 = vld [vmem:[%s3 + $0x14] sm:$0xf]
  %v328 = vld [vmem:[%s3 + $0x18] sm:$0xf]
  %v329 = vld [vmem:[%s3 + $0x1c] sm:$0xf]
  %v330 = vpack.c.bf16 %v307, %v306
  %v331 = vpack.c.bf16 %v309, %v308
  %v332 = vpack.c.bf16 %v311, %v310
  %v333 = vpack.c.bf16 %v313, %v312
  %v334 = vpack.c.bf16 %v315, %v314
  %v335 = vpack.c.bf16 %v317, %v316
  %v336 = vpack.c.bf16 %v319, %v318
  %v337 = vpack.c.bf16 %v321, %v320
  %v338 = vld [vmem:[%s4] sm:$0xff]
  %v339 = vld [vmem:[%s4 + $0x8] sm:$0xff]
  %v340 = vld [vmem:[%s4 + $0x10] sm:$0xff]
  %v341 = vld [vmem:[%s4 + $0x18] sm:$0xff]
  %v342 = vld [vmem:[%s4 + $0x20] sm:$0xff]
  %v343 = vld [vmem:[%s4 + $0x28] sm:$0xff]
  %v344 = vld [vmem:[%s4 + $0x30] sm:$0xff]
  %v345 = vld [vmem:[%s4 + $0x38] sm:$0xff]
  %347 = vset.pattern.permute.xlu0 0
  %348 = vperm.xlu0 %347, %v338
  %v349 = vpop.permute.xlu0 %348
  %352 = vset.pattern.permute.xlu0 0
  %353 = vperm.xlu0 %352, %v339
  %v354 = vpop.permute.xlu0 %353
  %357 = vset.pattern.permute.xlu0 0
  %358 = vperm.xlu0 %357, %v340
  %v359 = vpop.permute.xlu0 %358
  %362 = vset.pattern.permute.xlu0 0
  %363 = vperm.xlu0 %362, %v341
  %v364 = vpop.permute.xlu0 %363
  %367 = vset.pattern.permute.xlu0 0
  %368 = vperm.xlu0 %367, %v342
  %v369 = vpop.permute.xlu0 %368
  %372 = vset.pattern.permute.xlu0 0
  %373 = vperm.xlu0 %372, %v343
  %v374 = vpop.permute.xlu0 %373
  %377 = vset.pattern.permute.xlu0 0
  %378 = vperm.xlu0 %377, %v344
  %v379 = vpop.permute.xlu0 %378
  %382 = vset.pattern.permute.xlu0 0
  %383 = vperm.xlu0 %382, %v345
  %v384 = vpop.permute.xlu0 %383
  %v394 = vunpack.c.l.b16 %v322
  %v395 = vunpack.c.l.b16 %v323
  %v396 = vunpack.c.l.b16 %v324
  %v397 = vunpack.c.l.b16 %v325
  %v398 = vunpack.c.l.b16 %v326
  %v399 = vunpack.c.l.b16 %v327
  %v400 = vunpack.c.l.b16 %v328
  %v401 = vunpack.c.l.b16 %v329
  %v402 = vpack.c.b16 %v395, %v394
  %v403 = vpack.c.b16 %v397, %v396
  %v404 = vpack.c.b16 %v399, %v398
  %v405 = vpack.c.b16 %v401, %v400
  %410 = vmatprep.subr.bf16.mxu0 0
  %411 = vmatpush1.bf16.msra.mxu0 %v337
  %412 = vmatprep.subr.bf16.mxu0 0
  %413 = vmatpush1.bf16.msra.mxu0 %v336
  %414 = vmatprep.subr.bf16.mxu0 0
  %415 = vmatpush1.bf16.msra.mxu0 %v335
  %416 = vmatprep.subr.bf16.mxu0 0
  %417 = vmatpush1.bf16.msra.mxu0 %v334
  %418 = vmatprep.subr.bf16.mxu0 0
  %419 = vmatpush1.bf16.msra.mxu0 %v333
  %420 = vmatprep.subr.bf16.mxu0 0
  %421 = vmatpush1.bf16.msra.mxu0 %v332
  %422 = vmatprep.subr.bf16.mxu0 0
  %423 = vmatpush1.bf16.msra.mxu0 %v331
  %424 = vmatprep.subr.bf16.mxu0 0
  %425 = vmatpush1.bf16.msra.mxu0 %v330
  %426 = vmatprep.subr.bf16.mxu0 0
  %427 = vmatpush2.bf16.msra.mxu0 0
  %428 = vmatprep.subr.bf16.mxu0 0
  %429 = vmatpush2.bf16.msra.mxu0 0
  %430 = vmatprep.subr.bf16.mxu0 0
  %431 = vmatpush2.bf16.msra.mxu0 0
  %432 = vmatprep.subr.bf16.mxu0 0
  %433 = vmatpush2.bf16.msra.mxu0 0
  %434 = vmatprep.subr.bf16.mxu0 0
  %435 = vmatpush2.bf16.msra.mxu0 0
  %436 = vmatprep.subr.bf16.mxu0 0
  %437 = vmatpush2.bf16.msra.mxu0 0
  %438 = vmatprep.subr.bf16.mxu0 0
  %439 = vmatpush2.bf16.msra.mxu0 0
  %440 = vmatprep.subr.bf16.mxu0 0
  %441 = vmatpush2.bf16.msra.mxu0 0
  %442 = vmatprep.mubr.bf16.mxu0 0
  %443 = vmatmul.mubr.bf16.gmra.mxu0 %v402
  %v444 = vpop.f32.mrf.mxu0
  %v445 = vadd.f32 %v349, %v444
  %v446 = vpop.f32.mrf.mxu0
  %v447 = vpop.f32.mrf.mxu0
  %v448 = vadd.f32 %v354, %v447
  %v449 = vpop.f32.mrf.mxu0
  %450 = vmatprep.mubr.bf16.mxu0 0
  %451 = vmatmul.mubr.bf16.gmra.mxu0 %v403
  %v452 = vpop.f32.mrf.mxu0
  %v453 = vadd.f32 %v359, %v452
  %v454 = vpop.f32.mrf.mxu0
  %v455 = vpop.f32.mrf.mxu0
  %v456 = vadd.f32 %v364, %v455
  %v457 = vpop.f32.mrf.mxu0
  %458 = vmatprep.mubr.bf16.mxu0 0
  %459 = vmatmul.mubr.bf16.gmra.mxu0 %v404
  %v460 = vpop.f32.mrf.mxu0
  %v461 = vadd.f32 %v369, %v460
  %v462 = vpop.f32.mrf.mxu0
  %v463 = vpop.f32.mrf.mxu0
  %v464 = vadd.f32 %v374, %v463
  %v465 = vpop.f32.mrf.mxu0
  %466 = vmatprep.mubr.bf16.mxu0 0
  %467 = vmatmul.mubr.bf16.gmra.mxu0 %v405
  %v468 = vpop.f32.mrf.mxu0
  %v469 = vadd.f32 %v379, %v468
  %v470 = vpop.f32.mrf.mxu0
  %v471 = vpop.f32.mrf.mxu0
  %v472 = vadd.f32 %v384, %v471
  %v473 = vpop.f32.mrf.mxu0
  %474 = vdwg.mxu0
  %v475 = vmax.f32 %v445, 0.0
  %v476 = vmax.f32 %v448, 0.0
  %v477 = vmax.f32 %v453, 0.0
  %v478 = vmax.f32 %v456, 0.0
  %v479 = vmax.f32 %v461, 0.0
  %v480 = vmax.f32 %v464, 0.0
  %v481 = vmax.f32 %v469, 0.0
  %v482 = vmax.f32 %v472, 0.0
  %v483 = vld [vmem:[%s5] sm:$0xf]
  %v484 = vpack.c.bf16 %v476, %v475
  %v485 = vpack.c.bf16 %v478, %v477
  %v486 = vpack.c.bf16 %v480, %v479
  %v487 = vpack.c.bf16 %v482, %v481
  %v488 = vld [vmem:[%s6] sm:$0xff]
  %490 = vset.pattern.permute.xlu0 0
  %491 = vperm.xlu0 %490, %v488
  %v492 = vpop.permute.xlu0 %491
  %vm494 = vcmask 523264
  %v496 = vsel %vm494, %v483, 0
  %498 = vmatprep.subr.bf16.mxu0 0
  %499 = vmatpush1.bf16.msra.mxu0 0
  %500 = vmatprep.subr.bf16.mxu0 0
  %501 = vmatpush1.bf16.msra.mxu0 0
  %502 = vmatprep.subr.bf16.mxu0 0
  %503 = vmatpush1.bf16.msra.mxu0 0
  %504 = vmatprep.subr.bf16.mxu0 0
  %505 = vmatpush1.bf16.msra.mxu0 0
  %506 = vmatprep.subr.bf16.mxu0 0
  %507 = vmatpush1.bf16.msra.mxu0 %v487
  %508 = vmatprep.subr.bf16.mxu0 0
  %509 = vmatpush1.bf16.msra.mxu0 %v486
  %510 = vmatprep.subr.bf16.mxu0 0
  %511 = vmatpush1.bf16.msra.mxu0 %v485
  %512 = vmatprep.subr.bf16.mxu0 0
  %513 = vmatpush1.bf16.msra.mxu0 %v484
  %514 = vmatprep.subr.bf16.mxu0 0
  %515 = vmatpush2.bf16.msra.mxu0 0
  %516 = vmatprep.subr.bf16.mxu0 0
  %517 = vmatpush2.bf16.msra.mxu0 0
  %518 = vmatprep.subr.bf16.mxu0 0
  %519 = vmatpush2.bf16.msra.mxu0 0
  %520 = vmatprep.subr.bf16.mxu0 0
  %521 = vmatpush2.bf16.msra.mxu0 0
  %522 = vmatprep.subr.bf16.mxu0 0
  %523 = vmatpush2.bf16.msra.mxu0 0
  %524 = vmatprep.subr.bf16.mxu0 0
  %525 = vmatpush2.bf16.msra.mxu0 0
  %526 = vmatprep.subr.bf16.mxu0 0
  %527 = vmatpush2.bf16.msra.mxu0 0
  %528 = vmatprep.subr.bf16.mxu0 0
  %529 = vmatpush2.bf16.msra.mxu0 0
  %530 = vmatprep.mubr.bf16.mxu0 0
  %531 = vmatmul.mubr.bf16.gmra.mxu0 %v496
  %v532 = vpop.f32.mrf.mxu0
  %v533 = vadd.f32 %v492, %v532
  %v534 = vpop.f32.mrf.mxu0
  %v535 = vpop.f32.mrf.mxu0
  %v536 = vpop.f32.mrf.mxu0
  %537 = vdwg.mxu0
  %vm538 = vcmask 64512
  %v539 = vsel %vm538, %v533, -inf
  %v540 = vrot.slane %v539, 4
  %v541 = vmax.f32 %v539, %v540
  %v542 = vrot.slane %v541, 2
  %v543 = vmax.f32 %v541, %v542
  %v544 = vrot.slane %v543, 1
  %v545 = vmax.f32 %v543, %v544
  %v546 = vsub.f32 %v533, %v545
  %v547 = vmul.f32 %v546, 1.442695
  %v548 = vpow.pop %v547
  %v549 = vsel %vm538, %v548, 0.0
  %v550 = vrot.slane %v549, 4
  %v551 = vadd.f32 %v549, %v550
  %v552 = vrot.slane %v551, 2
  %v553 = vadd.f32 %v551, %v552
  %v554 = vrot.slane %v553, 1
  %v555 = vadd.f32 %v553, %v554
  %v556 = vlog2.pop %v555
  %v557 = vmul.f32 %v556, 0.6931472
  %v558 = vadd.f32 %v545, %v557
  %v559 = vsub.f32 %v533, %v558
  %560 = vst.msk [vmem:[%s7] sm:$0xff] %vm538, %v559
  // Predicated region
  $region30: #{improved_health_model_forward.1} parent=0 // pred_check
    _
  $region31: #{improved_health_model_forward.1} parent=0 // pred_check_branch
    %562 = sbr.rel (0) target = $region33
  $region32: #{improved_health_model_forward.1} parent=0 // pred_region
    _
  $region33: #{improved_health_model_forward.1} parent=0 // pred_fallthru
    _
  // Predicated region
  $region34: #{improved_health_model_forward.1} parent=0 // pred_check
    _
  $region35: #{improved_health_model_forward.1} parent=0 // pred_check_branch
    %564 = sbr.rel (0) target = $region37
  $region36: #{improved_health_model_forward.1} parent=0 // pred_region
    _
  $region37: #{improved_health_model_forward.1} parent=0 // pred_fallthru
    _

</llo_original>
